<compile_context>
chip_gen: v6e
topology: v6e:2x2x1
jax: 0.10.0
libtpu: 0.0.40
codegen_flags: <defaults>
</compile_context>

<pallas_src>
import jax
import jax.numpy as jnp
from jax.experimental import pallas as pl
from jax.experimental.pallas import tpu as pltpu

EPS = 1e-5  # torch.nn.InstanceNorm1d default


def residual_block_kernel(x_ref,
                          w1_ref, b1_ref, g1_ref, be1_ref,
                          w2_ref, b2_ref, g2_ref, be2_ref,
                          o_ref):
    """One batch sub-block (Nb elements) per grid step.

    x_ref  : (Nb, C, L)  input slab (f32)
    w*_ref : (C, 3C)     packed conv weights, bf16; column block k holds tap k
    b*_ref : (C, 1)      conv bias (f32)
    g*_ref : (C, 1)      instance-norm gamma (f32)
    be*_ref: (C, 1)      instance-norm beta  (f32)
    o_ref  : (Nb, C, L)  output slab
    """
    Nb, C, L = x_ref.shape

    # Load weights / params once per grid step (shared across the sub-batch).
    w1 = w1_ref[...]
    w2 = w2_ref[...]
    b1, g1, be1 = b1_ref[...], g1_ref[...], be1_ref[...]
    b2, g2, be2 = b2_ref[...], g2_ref[...], be2_ref[...]

    def conv_instnorm(h, w_pk, b, g, be):
        # Reflection-padded kernel=3 conv as ONE MXU matmul.  Shifted taps are
        # built in-register (reflection: col 0 <- h[:,1], col L-1 <- h[:,L-2]),
        # stacked along the channel (sublane) axis -> (3C, L), and contracted
        # against the packed (C, 3C) weight with f32 accumulation.
        left = jnp.concatenate([h[:, 1:2], h[:, :L - 1]], axis=1)        # h[:, l-1]
        right = jnp.concatenate([h[:, 1:], h[:, L - 2:L - 1]], axis=1)    # h[:, l+1]
        stk = jnp.concatenate([left, h, right], axis=0)                   # (3C, L)
        y = jnp.dot(w_pk, stk.astype(jnp.bfloat16),
                    preferred_element_type=jnp.float32)                   # (C, L) f32
        y = y + b                                                         # bias once
        # InstanceNorm1d(affine=True): biased variance over L, f32 math.
        m = jnp.mean(y, axis=1, keepdims=True)
        v = jnp.mean((y - m) ** 2, axis=1, keepdims=True)
        return g * ((y - m) * jax.lax.rsqrt(v + EPS)) + be

    for n in range(Nb):  # small static sub-batch, fully unrolled
        x = x_ref[n].astype(jnp.float32)                 # (C, L)
        h = conv_instnorm(x, w1, b1, g1, be1)
        h = jnp.maximum(h, 0.0)                          # ReLU
        h = conv_instnorm(h, w2, b2, g2, be2)
        o_ref[n] = (h + x).astype(o_ref.dtype)           # residual add


def residual_block(x, params, *, block_n=None):
    """x: (N, C, L) float32.

    params: (w1, b1, g1, be1, w2, b2, g2, be2) with
      w*: (3, C, C)  conv weight, layout (k, out_ch, in_ch)
      b*, g*, be*: (C, 1)
    """
    w1, b1, g1, be1, w2, b2, g2, be2 = params
    N, C, L = x.shape

    # Pack the 3 conv taps into a single (C, 3C) matrix (one MXU matmul with
    # K = 3C per conv) and cast to bf16 once; accumulation stays f32 in-kernel.
    def pack(w):  # (k, out, in) -> (out, 3*in); column block k == tap k
        return jnp.concatenate([w[0], w[1], w[2]], axis=1).astype(jnp.bfloat16)

    pkt = (pack(w1), b1, g1, be1, pack(w2), b2, g2, be2)

    # Block several batch elements per grid step when L is small (amortizes
    # per-grid-step overhead; keeps more useful lanes busy).
    if block_n is None:
        want = max(1, 128 // max(L, 1))
        block_n = 1
        for d in range(1, min(N, want) + 1):
            if N % d == 0:
                block_n = d
    grid = (N // block_n,)

    def const_spec(p):
        nd = p.ndim
        return pl.BlockSpec(p.shape, lambda n, _nd=nd: (0,) * _nd)

    return pl.pallas_call(
        residual_block_kernel,
        out_shape=jax.ShapeDtypeStruct((N, C, L), x.dtype),
        grid_spec=pltpu.PrefetchScalarGridSpec(
            num_scalar_prefetch=0,
            grid=grid,
            in_specs=[pl.BlockSpec((block_n, C, L), lambda n: (n, 0, 0))]
                     + [const_spec(p) for p in pkt],
            out_specs=pl.BlockSpec((block_n, C, L), lambda n: (n, 0, 0)),
        ),
        compiler_params=pltpu.CompilerParams(
            dimension_semantics=("parallel",),
            vmem_limit_bytes=32 * 1024 * 1024),
    )(x, *pkt)


# ----------------------------- pure-JAX reference -----------------------------
def reference(x, params):
    w1, b1, g1, be1, w2, b2, g2, be2 = params

    def conv(inp, w_koi, b):
        w_oik = jnp.transpose(w_koi, (1, 2, 0))            # (O, I, K)
        p = jnp.pad(inp, ((0, 0), (0, 0), (1, 1)), mode="reflect")
        y = jax.lax.conv_general_dilated(
            p, w_oik, window_strides=(1,), padding="VALID",
            dimension_numbers=("NCH", "OIH", "NCH"))
        return y + b.reshape(1, -1, 1)

    def inorm(y, g, be):
        m = y.mean(axis=2, keepdims=True)
        v = ((y - m) ** 2).mean(axis=2, keepdims=True)
        return g.reshape(1, -1, 1) * (y - m) / jnp.sqrt(v + EPS) + be.reshape(1, -1, 1)

    h = jax.nn.relu(inorm(conv(x, w1, b1), g1, be1))
    h = inorm(conv(h, w2, b2), g2, be2)
    return h + x


if __name__ == "__main__":
    N, C, L = 2, 4, 16  # batch, channels, sequence length
    key = jax.random.PRNGKey(0)
    kx, k1, k2, k3, k4, k5, k6, k7, k8 = jax.random.split(key, 9)

    x = jax.random.normal(kx, (N, C, L), dtype=jnp.float32)

    # Deterministic parameter init (shapes from the module __init__).
    scale = 1.0 / jnp.sqrt(C * 3.0)
    w1 = jax.random.uniform(k1, (3, C, C), jnp.float32, -scale, scale)   # (k, out, in)
    b1 = jax.random.uniform(k2, (C, 1), jnp.float32, -scale, scale)
    w2 = jax.random.uniform(k3, (3, C, C), jnp.float32, -scale, scale)
    b2 = jax.random.uniform(k4, (C, 1), jnp.float32, -scale, scale)
    # InstanceNorm affine params (torch defaults are ones/zeros; perturbed here
    # deterministically so the affine path is actually exercised).
    g1 = 1.0 + 0.1 * jax.random.normal(k5, (C, 1), jnp.float32)
    be1 = 0.1 * jax.random.normal(k6, (C, 1), jnp.float32)
    g2 = 1.0 + 0.1 * jax.random.normal(k7, (C, 1), jnp.float32)
    be2 = 0.1 * jax.random.normal(k8, (C, 1), jnp.float32)

    params = (w1, b1, g1, be1, w2, b2, g2, be2)

    out = residual_block(x, params)
    out = jax.block_until_ready(out)

    ref = reference(x, params)
    assert out.shape == (N, C, L)
    # Tolerance loosened vs the f32 reference because the conv matmuls use
    # bf16 inputs (f32 accumulation), per the performance review.
    assert jnp.allclose(out, ref, atol=5e-2, rtol=5e-2), "mismatch vs reference"

    print("KERNEL_OK")
</pallas_src>

<mosaic_0001>
module attributes {stable_mosaic.version = 11 : i64} {
  func.func @residual_block_kernel(%arg0: i32, %arg1: memref<2x4x16xf32, #tpu.memory_space<vmem>>, %arg2: memref<4x12xbf16, #tpu.memory_space<vmem>>, %arg3: memref<4x1xf32, #tpu.memory_space<vmem>>, %arg4: memref<4x1xf32, #tpu.memory_space<vmem>>, %arg5: memref<4x1xf32, #tpu.memory_space<vmem>>, %arg6: memref<4x12xbf16, #tpu.memory_space<vmem>>, %arg7: memref<4x1xf32, #tpu.memory_space<vmem>>, %arg8: memref<4x1xf32, #tpu.memory_space<vmem>>, %arg9: memref<4x1xf32, #tpu.memory_space<vmem>>, %arg10: memref<2x4x16xf32, #tpu.memory_space<vmem>>) attributes {dimension_semantics = [#tpu.dimension_semantics<parallel>], iteration_bounds = array<i64: 1>, scalar_prefetch = 0 : i64, scratch_operands = 0 : i64, tpu.core_type = #tpu.core_type<tc>, window_params = [{transform_indices = @transform_0, window_bounds = array<i64: 2, 4, 16>}, {pipeline_mode = #tpu.pipeline_mode<synchronous>, transform_indices = @transform_1, window_bounds = array<i64: 4, 12>}, {pipeline_mode = #tpu.pipeline_mode<synchronous>, transform_indices = @transform_2, window_bounds = array<i64: 4, 1>}, {pipeline_mode = #tpu.pipeline_mode<synchronous>, transform_indices = @transform_3, window_bounds = array<i64: 4, 1>}, {pipeline_mode = #tpu.pipeline_mode<synchronous>, transform_indices = @transform_4, window_bounds = array<i64: 4, 1>}, {pipeline_mode = #tpu.pipeline_mode<synchronous>, transform_indices = @transform_5, window_bounds = array<i64: 4, 12>}, {pipeline_mode = #tpu.pipeline_mode<synchronous>, transform_indices = @transform_6, window_bounds = array<i64: 4, 1>}, {pipeline_mode = #tpu.pipeline_mode<synchronous>, transform_indices = @transform_7, window_bounds = array<i64: 4, 1>}, {pipeline_mode = #tpu.pipeline_mode<synchronous>, transform_indices = @transform_8, window_bounds = array<i64: 4, 1>}, {transform_indices = @transform_9, window_bounds = array<i64: 2, 4, 16>}]} {
    %c0 = arith.constant 0 : index
    %c0_0 = arith.constant 0 : index
    %0 = vector.load %arg2[%c0, %c0_0] : memref<4x12xbf16, #tpu.memory_space<vmem>>, vector<4x12xbf16>
    %c0_1 = arith.constant 0 : index
    %c0_2 = arith.constant 0 : index
    %1 = vector.load %arg6[%c0_1, %c0_2] : memref<4x12xbf16, #tpu.memory_space<vmem>>, vector<4x12xbf16>
    %c0_3 = arith.constant 0 : index
    %c0_4 = arith.constant 0 : index
    %2 = vector.load %arg3[%c0_3, %c0_4] : memref<4x1xf32, #tpu.memory_space<vmem>>, vector<4x1xf32>
    %c0_5 = arith.constant 0 : index
    %c0_6 = arith.constant 0 : index
    %3 = vector.load %arg4[%c0_5, %c0_6] : memref<4x1xf32, #tpu.memory_space<vmem>>, vector<4x1xf32>
    %c0_7 = arith.constant 0 : index
    %c0_8 = arith.constant 0 : index
    %4 = vector.load %arg5[%c0_7, %c0_8] : memref<4x1xf32, #tpu.memory_space<vmem>>, vector<4x1xf32>
    %c0_9 = arith.constant 0 : index
    %c0_10 = arith.constant 0 : index
    %5 = vector.load %arg7[%c0_9, %c0_10] : memref<4x1xf32, #tpu.memory_space<vmem>>, vector<4x1xf32>
    %c0_11 = arith.constant 0 : index
    %c0_12 = arith.constant 0 : index
    %6 = vector.load %arg8[%c0_11, %c0_12] : memref<4x1xf32, #tpu.memory_space<vmem>>, vector<4x1xf32>
    %c0_13 = arith.constant 0 : index
    %c0_14 = arith.constant 0 : index
    %7 = vector.load %arg9[%c0_13, %c0_14] : memref<4x1xf32, #tpu.memory_space<vmem>>, vector<4x1xf32>
    %c0_15 = arith.constant 0 : index
    %c0_16 = arith.constant 0 : index
    %c0_17 = arith.constant 0 : index
    %8 = vector.load %arg1[%c0_15, %c0_16, %c0_17] : memref<2x4x16xf32, #tpu.memory_space<vmem>>, vector<1x4x16xf32>
    %9 = vector.shape_cast %8 : vector<1x4x16xf32> to vector<4x16xf32>
    %10 = vector.extract_strided_slice %9 {offsets = [0, 1], sizes = [4, 1], strides = [1, 1]} : vector<4x16xf32> to vector<4x1xf32>
    %11 = vector.extract_strided_slice %9 {offsets = [0, 0], sizes = [4, 15], strides = [1, 1]} : vector<4x16xf32> to vector<4x15xf32>
    %12 = tpu.concatenate %10, %11 in 1 : vector<4x1xf32>, vector<4x15xf32> -> vector<4x16xf32>
    %13 = vector.extract_strided_slice %9 {offsets = [0, 1], sizes = [4, 15], strides = [1, 1]} : vector<4x16xf32> to vector<4x15xf32>
    %14 = vector.extract_strided_slice %9 {offsets = [0, 14], sizes = [4, 1], strides = [1, 1]} : vector<4x16xf32> to vector<4x1xf32>
    %15 = tpu.concatenate %13, %14 in 1 : vector<4x15xf32>, vector<4x1xf32> -> vector<4x16xf32>
    %16 = tpu.concatenate %12, %9, %15 in 0 : vector<4x16xf32>, vector<4x16xf32>, vector<4x16xf32> -> vector<12x16xf32>
    %17 = arith.truncf %16 : vector<12x16xf32> to vector<12x16xbf16>
    %cst = arith.constant dense<0.000000e+00> : vector<4x16xf32>
    %18 = tpu.matmul %0, %17, %cst {dimension_numbers = #tpu.dot_dimension_numbers<[1], [0], [0], [1], [0, 0, 1, 1], [], []>} : vector<4x12xbf16>, vector<12x16xbf16>, vector<4x16xf32> -> vector<4x16xf32>
    %19 = vector.broadcast %2 : vector<4x1xf32> to vector<4x16xf32>
    %20 = arith.addf %18, %19 : vector<4x16xf32>
    %cst_18 = arith.constant dense<0.000000e+00> : vector<4xf32>
    %21 = vector.multi_reduction <add>, %20, %cst_18 [1] : vector<4x16xf32> to vector<4xf32>
    %22 = vector.shape_cast %21 : vector<4xf32> to vector<4x1xf32>
    %cst_19 = arith.constant 1.600000e+01 : f32
    %23 = vector.broadcast %cst_19 : f32 to vector<4x1xf32>
    %24 = arith.divf %22, %23 : vector<4x1xf32>
    %25 = vector.broadcast %24 : vector<4x1xf32> to vector<4x16xf32>
    %26 = arith.subf %20, %25 : vector<4x16xf32>
    %27 = arith.mulf %26, %26 : vector<4x16xf32>
    %cst_20 = arith.constant dense<0.000000e+00> : vector<4xf32>
    %28 = vector.multi_reduction <add>, %27, %cst_20 [1] : vector<4x16xf32> to vector<4xf32>
    %29 = vector.shape_cast %28 : vector<4xf32> to vector<4x1xf32>
    %cst_21 = arith.constant 1.600000e+01 : f32
    %30 = vector.broadcast %cst_21 : f32 to vector<4x1xf32>
    %31 = arith.divf %29, %30 : vector<4x1xf32>
    %32 = vector.broadcast %24 : vector<4x1xf32> to vector<4x16xf32>
    %33 = arith.subf %20, %32 : vector<4x16xf32>
    %cst_22 = arith.constant 9.99999974E-6 : f32
    %34 = vector.broadcast %cst_22 : f32 to vector<4x1xf32>
    %35 = arith.addf %31, %34 : vector<4x1xf32>
    %36 = math.rsqrt %35 : vector<4x1xf32>
    %37 = vector.broadcast %36 : vector<4x1xf32> to vector<4x16xf32>
    %38 = arith.mulf %33, %37 : vector<4x16xf32>
    %39 = vector.broadcast %3 : vector<4x1xf32> to vector<4x16xf32>
    %40 = arith.mulf %39, %38 : vector<4x16xf32>
    %41 = vector.broadcast %4 : vector<4x1xf32> to vector<4x16xf32>
    %42 = arith.addf %40, %41 : vector<4x16xf32>
    %cst_23 = arith.constant 0.000000e+00 : f32
    %43 = vector.broadcast %cst_23 : f32 to vector<4x16xf32>
    %44 = arith.maximumf %42, %43 : vector<4x16xf32>
    %45 = vector.extract_strided_slice %44 {offsets = [0, 1], sizes = [4, 1], strides = [1, 1]} : vector<4x16xf32> to vector<4x1xf32>
    %46 = vector.extract_strided_slice %44 {offsets = [0, 0], sizes = [4, 15], strides = [1, 1]} : vector<4x16xf32> to vector<4x15xf32>
    %47 = tpu.concatenate %45, %46 in 1 : vector<4x1xf32>, vector<4x15xf32> -> vector<4x16xf32>
    %48 = vector.extract_strided_slice %44 {offsets = [0, 1], sizes = [4, 15], strides = [1, 1]} : vector<4x16xf32> to vector<4x15xf32>
    %49 = vector.extract_strided_slice %44 {offsets = [0, 14], sizes = [4, 1], strides = [1, 1]} : vector<4x16xf32> to vector<4x1xf32>
    %50 = tpu.concatenate %48, %49 in 1 : vector<4x15xf32>, vector<4x1xf32> -> vector<4x16xf32>
    %51 = tpu.concatenate %47, %44, %50 in 0 : vector<4x16xf32>, vector<4x16xf32>, vector<4x16xf32> -> vector<12x16xf32>
    %52 = arith.truncf %51 : vector<12x16xf32> to vector<12x16xbf16>
    %cst_24 = arith.constant dense<0.000000e+00> : vector<4x16xf32>
    %53 = tpu.matmul %1, %52, %cst_24 {dimension_numbers = #tpu.dot_dimension_numbers<[1], [0], [0], [1], [0, 0, 1, 1], [], []>} : vector<4x12xbf16>, vector<12x16xbf16>, vector<4x16xf32> -> vector<4x16xf32>
    %54 = vector.broadcast %5 : vector<4x1xf32> to vector<4x16xf32>
    %55 = arith.addf %53, %54 : vector<4x16xf32>
    %cst_25 = arith.constant dense<0.000000e+00> : vector<4xf32>
    %56 = vector.multi_reduction <add>, %55, %cst_25 [1] : vector<4x16xf32> to vector<4xf32>
    %57 = vector.shape_cast %56 : vector<4xf32> to vector<4x1xf32>
    %cst_26 = arith.constant 1.600000e+01 : f32
    %58 = vector.broadcast %cst_26 : f32 to vector<4x1xf32>
    %59 = arith.divf %57, %58 : vector<4x1xf32>
    %60 = vector.broadcast %59 : vector<4x1xf32> to vector<4x16xf32>
    %61 = arith.subf %55, %60 : vector<4x16xf32>
    %62 = arith.mulf %61, %61 : vector<4x16xf32>
    %cst_27 = arith.constant dense<0.000000e+00> : vector<4xf32>
    %63 = vector.multi_reduction <add>, %62, %cst_27 [1] : vector<4x16xf32> to vector<4xf32>
    %64 = vector.shape_cast %63 : vector<4xf32> to vector<4x1xf32>
    %cst_28 = arith.constant 1.600000e+01 : f32
    %65 = vector.broadcast %cst_28 : f32 to vector<4x1xf32>
    %66 = arith.divf %64, %65 : vector<4x1xf32>
    %67 = vector.broadcast %59 : vector<4x1xf32> to vector<4x16xf32>
    %68 = arith.subf %55, %67 : vector<4x16xf32>
    %cst_29 = arith.constant 9.99999974E-6 : f32
    %69 = vector.broadcast %cst_29 : f32 to vector<4x1xf32>
    %70 = arith.addf %66, %69 : vector<4x1xf32>
    %71 = math.rsqrt %70 : vector<4x1xf32>
    %72 = vector.broadcast %71 : vector<4x1xf32> to vector<4x16xf32>
    %73 = arith.mulf %68, %72 : vector<4x16xf32>
    %74 = vector.broadcast %6 : vector<4x1xf32> to vector<4x16xf32>
    %75 = arith.mulf %74, %73 : vector<4x16xf32>
    %76 = vector.broadcast %7 : vector<4x1xf32> to vector<4x16xf32>
    %77 = arith.addf %75, %76 : vector<4x16xf32>
    %78 = arith.addf %77, %9 : vector<4x16xf32>
    %c0_30 = arith.constant 0 : index
    %c0_31 = arith.constant 0 : index
    %c0_32 = arith.constant 0 : index
    %79 = vector.load %arg10[%c0_30, %c0_31, %c0_32] : memref<2x4x16xf32, #tpu.memory_space<vmem>>, vector<1x4x16xf32>
    %80 = vector.shape_cast %79 : vector<1x4x16xf32> to vector<4x16xf32>
    %81 = vector.shape_cast %78 : vector<4x16xf32> to vector<1x4x16xf32>
    tpu.vector_store %arg10[%c0_30, %c0_31, %c0_32], %81 {strides = array<i32>} : memref<2x4x16xf32, #tpu.memory_space<vmem>>, vector<1x4x16xf32>,
    %c1 = arith.constant 1 : index
    %c0_33 = arith.constant 0 : index
    %c0_34 = arith.constant 0 : index
    %82 = vector.load %arg1[%c1, %c0_33, %c0_34] : memref<2x4x16xf32, #tpu.memory_space<vmem>>, vector<1x4x16xf32>
    %83 = vector.shape_cast %82 : vector<1x4x16xf32> to vector<4x16xf32>
    %84 = vector.extract_strided_slice %83 {offsets = [0, 1], sizes = [4, 1], strides = [1, 1]} : vector<4x16xf32> to vector<4x1xf32>
    %85 = vector.extract_strided_slice %83 {offsets = [0, 0], sizes = [4, 15], strides = [1, 1]} : vector<4x16xf32> to vector<4x15xf32>
    %86 = tpu.concatenate %84, %85 in 1 : vector<4x1xf32>, vector<4x15xf32> -> vector<4x16xf32>
    %87 = vector.extract_strided_slice %83 {offsets = [0, 1], sizes = [4, 15], strides = [1, 1]} : vector<4x16xf32> to vector<4x15xf32>
    %88 = vector.extract_strided_slice %83 {offsets = [0, 14], sizes = [4, 1], strides = [1, 1]} : vector<4x16xf32> to vector<4x1xf32>
    %89 = tpu.concatenate %87, %88 in 1 : vector<4x15xf32>, vector<4x1xf32> -> vector<4x16xf32>
    %90 = tpu.concatenate %86, %83, %89 in 0 : vector<4x16xf32>, vector<4x16xf32>, vector<4x16xf32> -> vector<12x16xf32>
    %91 = arith.truncf %90 : vector<12x16xf32> to vector<12x16xbf16>
    %cst_35 = arith.constant dense<0.000000e+00> : vector<4x16xf32>
    %92 = tpu.matmul %0, %91, %cst_35 {dimension_numbers = #tpu.dot_dimension_numbers<[1], [0], [0], [1], [0, 0, 1, 1], [], []>} : vector<4x12xbf16>, vector<12x16xbf16>, vector<4x16xf32> -> vector<4x16xf32>
    %93 = vector.broadcast %2 : vector<4x1xf32> to vector<4x16xf32>
    %94 = arith.addf %92, %93 : vector<4x16xf32>
    %cst_36 = arith.constant dense<0.000000e+00> : vector<4xf32>
    %95 = vector.multi_reduction <add>, %94, %cst_36 [1] : vector<4x16xf32> to vector<4xf32>
    %96 = vector.shape_cast %95 : vector<4xf32> to vector<4x1xf32>
    %cst_37 = arith.constant 1.600000e+01 : f32
    %97 = vector.broadcast %cst_37 : f32 to vector<4x1xf32>
    %98 = arith.divf %96, %97 : vector<4x1xf32>
    %99 = vector.broadcast %98 : vector<4x1xf32> to vector<4x16xf32>
    %100 = arith.subf %94, %99 : vector<4x16xf32>
    %101 = arith.mulf %100, %100 : vector<4x16xf32>
    %cst_38 = arith.constant dense<0.000000e+00> : vector<4xf32>
    %102 = vector.multi_reduction <add>, %101, %cst_38 [1] : vector<4x16xf32> to vector<4xf32>
    %103 = vector.shape_cast %102 : vector<4xf32> to vector<4x1xf32>
    %cst_39 = arith.constant 1.600000e+01 : f32
    %104 = vector.broadcast %cst_39 : f32 to vector<4x1xf32>
    %105 = arith.divf %103, %104 : vector<4x1xf32>
    %106 = vector.broadcast %98 : vector<4x1xf32> to vector<4x16xf32>
    %107 = arith.subf %94, %106 : vector<4x16xf32>
    %cst_40 = arith.constant 9.99999974E-6 : f32
    %108 = vector.broadcast %cst_40 : f32 to vector<4x1xf32>
    %109 = arith.addf %105, %108 : vector<4x1xf32>
    %110 = math.rsqrt %109 : vector<4x1xf32>
    %111 = vector.broadcast %110 : vector<4x1xf32> to vector<4x16xf32>
    %112 = arith.mulf %107, %111 : vector<4x16xf32>
    %113 = vector.broadcast %3 : vector<4x1xf32> to vector<4x16xf32>
    %114 = arith.mulf %113, %112 : vector<4x16xf32>
    %115 = vector.broadcast %4 : vector<4x1xf32> to vector<4x16xf32>
    %116 = arith.addf %114, %115 : vector<4x16xf32>
    %cst_41 = arith.constant 0.000000e+00 : f32
    %117 = vector.broadcast %cst_41 : f32 to vector<4x16xf32>
    %118 = arith.maximumf %116, %117 : vector<4x16xf32>
    %119 = vector.extract_strided_slice %118 {offsets = [0, 1], sizes = [4, 1], strides = [1, 1]} : vector<4x16xf32> to vector<4x1xf32>
    %120 = vector.extract_strided_slice %118 {offsets = [0, 0], sizes = [4, 15], strides = [1, 1]} : vector<4x16xf32> to vector<4x15xf32>
    %121 = tpu.concatenate %119, %120 in 1 : vector<4x1xf32>, vector<4x15xf32> -> vector<4x16xf32>
    %122 = vector.extract_strided_slice %118 {offsets = [0, 1], sizes = [4, 15], strides = [1, 1]} : vector<4x16xf32> to vector<4x15xf32>
    %123 = vector.extract_strided_slice %118 {offsets = [0, 14], sizes = [4, 1], strides = [1, 1]} : vector<4x16xf32> to vector<4x1xf32>
    %124 = tpu.concatenate %122, %123 in 1 : vector<4x15xf32>, vector<4x1xf32> -> vector<4x16xf32>
    %125 = tpu.concatenate %121, %118, %124 in 0 : vector<4x16xf32>, vector<4x16xf32>, vector<4x16xf32> -> vector<12x16xf32>
    %126 = arith.truncf %125 : vector<12x16xf32> to vector<12x16xbf16>
    %cst_42 = arith.constant dense<0.000000e+00> : vector<4x16xf32>
    %127 = tpu.matmul %1, %126, %cst_42 {dimension_numbers = #tpu.dot_dimension_numbers<[1], [0], [0], [1], [0, 0, 1, 1], [], []>} : vector<4x12xbf16>, vector<12x16xbf16>, vector<4x16xf32> -> vector<4x16xf32>
    %128 = vector.broadcast %5 : vector<4x1xf32> to vector<4x16xf32>
    %129 = arith.addf %127, %128 : vector<4x16xf32>
    %cst_43 = arith.constant dense<0.000000e+00> : vector<4xf32>
    %130 = vector.multi_reduction <add>, %129, %cst_43 [1] : vector<4x16xf32> to vector<4xf32>
    %131 = vector.shape_cast %130 : vector<4xf32> to vector<4x1xf32>
    %cst_44 = arith.constant 1.600000e+01 : f32
    %132 = vector.broadcast %cst_44 : f32 to vector<4x1xf32>
    %133 = arith.divf %131, %132 : vector<4x1xf32>
    %134 = vector.broadcast %133 : vector<4x1xf32> to vector<4x16xf32>
    %135 = arith.subf %129, %134 : vector<4x16xf32>
    %136 = arith.mulf %135, %135 : vector<4x16xf32>
    %cst_45 = arith.constant dense<0.000000e+00> : vector<4xf32>
    %137 = vector.multi_reduction <add>, %136, %cst_45 [1] : vector<4x16xf32> to vector<4xf32>
    %138 = vector.shape_cast %137 : vector<4xf32> to vector<4x1xf32>
    %cst_46 = arith.constant 1.600000e+01 : f32
    %139 = vector.broadcast %cst_46 : f32 to vector<4x1xf32>
    %140 = arith.divf %138, %139 : vector<4x1xf32>
    %141 = vector.broadcast %133 : vector<4x1xf32> to vector<4x16xf32>
    %142 = arith.subf %129, %141 : vector<4x16xf32>
    %cst_47 = arith.constant 9.99999974E-6 : f32
    %143 = vector.broadcast %cst_47 : f32 to vector<4x1xf32>
    %144 = arith.addf %140, %143 : vector<4x1xf32>
    %145 = math.rsqrt %144 : vector<4x1xf32>
    %146 = vector.broadcast %145 : vector<4x1xf32> to vector<4x16xf32>
    %147 = arith.mulf %142, %146 : vector<4x16xf32>
    %148 = vector.broadcast %6 : vector<4x1xf32> to vector<4x16xf32>
    %149 = arith.mulf %148, %147 : vector<4x16xf32>
    %150 = vector.broadcast %7 : vector<4x1xf32> to vector<4x16xf32>
    %151 = arith.addf %149, %150 : vector<4x16xf32>
    %152 = arith.addf %151, %83 : vector<4x16xf32>
    %c1_48 = arith.constant 1 : index
    %c0_49 = arith.constant 0 : index
    %c0_50 = arith.constant 0 : index
    %153 = vector.load %arg10[%c1_48, %c0_49, %c0_50] : memref<2x4x16xf32, #tpu.memory_space<vmem>>, vector<1x4x16xf32>
    %154 = vector.shape_cast %153 : vector<1x4x16xf32> to vector<4x16xf32>
    %155 = vector.shape_cast %152 : vector<4x16xf32> to vector<1x4x16xf32>
    tpu.vector_store %arg10[%c1_48, %c0_49, %c0_50], %155 {strides = array<i32>} : memref<2x4x16xf32, #tpu.memory_space<vmem>>, vector<1x4x16xf32>,
    return
  }
  func.func @transform_0(%arg0: i32) -> (i32, i32, i32) {
    %c0_i32 = arith.constant 0 : i32
    %c0_i32_0 = arith.constant 0 : i32
    %c0_i32_1 = arith.constant 0 : i32
    return %arg0, %c0_i32, %c0_i32_0 : i32, i32, i32
  }
  func.func @transform_1(%arg0: i32) -> (i32, i32) {
    %c0_i32 = arith.constant 0 : i32
    %c0_i32_0 = arith.constant 0 : i32
    %c0_i32_1 = arith.constant 0 : i32
    return %c0_i32, %c0_i32_0 : i32, i32
  }
  func.func @transform_2(%arg0: i32) -> (i32, i32) {
    %c0_i32 = arith.constant 0 : i32
    %c0_i32_0 = arith.constant 0 : i32
    %c0_i32_1 = arith.constant 0 : i32
    return %c0_i32, %c0_i32_0 : i32, i32
  }
  func.func @transform_3(%arg0: i32) -> (i32, i32) {
    %c0_i32 = arith.constant 0 : i32
    %c0_i32_0 = arith.constant 0 : i32
    %c0_i32_1 = arith.constant 0 : i32
    return %c0_i32, %c0_i32_0 : i32, i32
  }
  func.func @transform_4(%arg0: i32) -> (i32, i32) {
    %c0_i32 = arith.constant 0 : i32
    %c0_i32_0 = arith.constant 0 : i32
    %c0_i32_1 = arith.constant 0 : i32
    return %c0_i32, %c0_i32_0 : i32, i32
  }
  func.func @transform_5(%arg0: i32) -> (i32, i32) {
    %c0_i32 = arith.constant 0 : i32
    %c0_i32_0 = arith.constant 0 : i32
    %c0_i32_1 = arith.constant 0 : i32
    return %c0_i32, %c0_i32_0 : i32, i32
  }
  func.func @transform_6(%arg0: i32) -> (i32, i32) {
    %c0_i32 = arith.constant 0 : i32
    %c0_i32_0 = arith.constant 0 : i32
    %c0_i32_1 = arith.constant 0 : i32
    return %c0_i32, %c0_i32_0 : i32, i32
  }
  func.func @transform_7(%arg0: i32) -> (i32, i32) {
    %c0_i32 = arith.constant 0 : i32
    %c0_i32_0 = arith.constant 0 : i32
    %c0_i32_1 = arith.constant 0 : i32
    return %c0_i32, %c0_i32_0 : i32, i32
  }
  func.func @transform_8(%arg0: i32) -> (i32, i32) {
    %c0_i32 = arith.constant 0 : i32
    %c0_i32_0 = arith.constant 0 : i32
    %c0_i32_1 = arith.constant 0 : i32
    return %c0_i32, %c0_i32_0 : i32, i32
  }
  func.func @transform_9(%arg0: i32) -> (i32, i32, i32) {
    %c0_i32 = arith.constant 0 : i32
    %c0_i32_0 = arith.constant 0 : i32
    %c0_i32_1 = arith.constant 0 : i32
    return %arg0, %c0_i32, %c0_i32_0 : i32, i32, i32
  }
}

</mosaic_0001>

<llo_original>
// kernel: tpu_custom_call.1
$region0: #{tpu_custom_call.1}
  #allocation0 [shape = 'u32[]', space=smem, size = 0x4, offset = 0x4, fixed_abs, tag = 'smem constant byte address 0x4 - core index']
  #allocation1 [shape = 'u32[144,128]{1,0:T(1,128)}', space=vmem, size = 0x12000, scoped, tag = 'internal scratch']
  %s0 = inlined_call_operand.vmem [shape: f32[2,4,16], index: 0, kind: input, shape index: {}]
  %s1 = inlined_call_operand.vmem [shape: bf16[4,12], index: 1, kind: input, shape index: {}]
  %s2 = inlined_call_operand.vmem [shape: f32[4,1], index: 2, kind: input, shape index: {}]
  %s3 = inlined_call_operand.vmem [shape: f32[4,1], index: 3, kind: input, shape index: {}]
  %s4 = inlined_call_operand.vmem [shape: f32[4,1], index: 4, kind: input, shape index: {}]
  %s5 = inlined_call_operand.vmem [shape: bf16[4,12], index: 5, kind: input, shape index: {}]
  %s6 = inlined_call_operand.vmem [shape: f32[4,1], index: 6, kind: input, shape index: {}]
  %s7 = inlined_call_operand.vmem [shape: f32[4,1], index: 7, kind: input, shape index: {}]
  %s8 = inlined_call_operand.vmem [shape: f32[4,1], index: 8, kind: input, shape index: {}]
  %s9 = inlined_call_operand.hbm [shape: f32[2,4,16], index: 9, kind: output, shape index: {}]
  %s10 = sld [smem:[#allocation0]]
  $region46: #{tpu_custom_call.1} parent=0
    _
  %s12 = ssub.s32 1, %s10
  %s13 = scalar_select 0, %s12, %s10
  $region1: #{tpu_custom_call.1} parent=0
    #allocation2 [shape = 'u8[4096]{0}', space=vmem, size = 0x1000, scoped, tag = 'output window, operand 0, single buffered']
    #allocation3 [shape = 's32[1]{0}', space=sflag, size = 0x4, scoped, tag = 'scoped memory for tpu_custom_call.1']
    %14 = vsyncpa [#allocation3], 0
    // Predicated region
    $region2: #{tpu_custom_call.1} parent=1 // pred_check
      _
    $region3: #{tpu_custom_call.1} parent=1 // pred_check_branch
      %16 = sbr.rel (0) target = $region5
    $region4: #{tpu_custom_call.1} parent=1 // pred_region
      _
    $region5: #{tpu_custom_call.1} parent=1 // pred_fallthru
      _
    // Predicated region
    $region6: #{tpu_custom_call.1} parent=1 // pred_check
      _
    $region7: #{tpu_custom_call.1} parent=1 // pred_check_branch
      %18 = sbr.rel (0) target = $region9
    $region8: #{tpu_custom_call.1} parent=1 // pred_region
      _
    $region9: #{tpu_custom_call.1} parent=1 // pred_fallthru
      _
    // Predicated region
    $region10: #{tpu_custom_call.1} parent=1 // pred_check
      _
    $region11: #{tpu_custom_call.1} parent=1 // pred_check_branch
      %20 = sbr.rel (0) target = $region13
    $region12: #{tpu_custom_call.1} parent=1 // pred_region
      _
    $region13: #{tpu_custom_call.1} parent=1 // pred_fallthru
      _
    // Predicated region
    $region14: #{tpu_custom_call.1} parent=1 // pred_check
      _
    $region15: #{tpu_custom_call.1} parent=1 // pred_check_branch
      %22 = sbr.rel (0) target = $region17
    $region16: #{tpu_custom_call.1} parent=1 // pred_region
      _
    $region17: #{tpu_custom_call.1} parent=1 // pred_fallthru
      _
    // Predicated region
    $region18: #{tpu_custom_call.1} parent=1 // pred_check
      _
    $region19: #{tpu_custom_call.1} parent=1 // pred_check_branch
      %24 = sbr.rel (0) target = $region21
    $region20: #{tpu_custom_call.1} parent=1 // pred_region
      _
    $region21: #{tpu_custom_call.1} parent=1 // pred_fallthru
      _
    // Predicated region
    $region22: #{tpu_custom_call.1} parent=1 // pred_check
      _
    $region23: #{tpu_custom_call.1} parent=1 // pred_check_branch
      %26 = sbr.rel (0) target = $region25
    $region24: #{tpu_custom_call.1} parent=1 // pred_region
      _
    $region25: #{tpu_custom_call.1} parent=1 // pred_fallthru
      _
    // Predicated region
    $region26: #{tpu_custom_call.1} parent=1 // pred_check
      _
    $region27: #{tpu_custom_call.1} parent=1 // pred_check_branch
      %28 = sbr.rel (0) target = $region29
    $region28: #{tpu_custom_call.1} parent=1 // pred_region
      _
    $region29: #{tpu_custom_call.1} parent=1 // pred_fallthru
      _
    // Predicated region
    $region30: #{tpu_custom_call.1} parent=1 // pred_check
      _
    $region31: #{tpu_custom_call.1} parent=1 // pred_check_branch
      %30 = sbr.rel (0) target = $region33
    $region32: #{tpu_custom_call.1} parent=1 // pred_region
      _
    $region33: #{tpu_custom_call.1} parent=1 // pred_fallthru
      _
    // Predicated region
    $region34: #{tpu_custom_call.1} parent=1 // pred_check
      _
    $region35: #{tpu_custom_call.1} parent=1 // pred_check_branch
      %32 = sbr.rel (0) target = $region37
    $region36: #{tpu_custom_call.1} parent=1 // pred_region
      _
    $region37: #{tpu_custom_call.1} parent=1 // pred_fallthru
      _
    %v34 = vld [vmem:[%s1] sm:$0x3]
    %v35 = vld [vmem:[%s5] sm:$0x3]
    %v36 = vld [vmem:[%s2] sm:$0xf]
    %v37 = vld [vmem:[%s3] sm:$0xf]
    %v38 = vld [vmem:[%s4] sm:$0xf]
    %v39 = vld [vmem:[%s6] sm:$0xf]
    %v40 = vld [vmem:[%s7] sm:$0xf]
    %v41 = vld [vmem:[%s8] sm:$0xf]
    %v42 = vld [vmem:[%s0] sm:$0xf]
    %44 = vrot.lane.b32.xlu0 %v42, 127
    %v45 = vpop.permute.xlu0 %44
    %47 = vrot.lane.b32.xlu0 %v42, 1
    %v48 = vpop.permute.xlu0 %47
    %vm50 = vcmask 7168
    %v51 = vsel %vm50, %v45, %v48
    %vm52 = vcmask 121856
    %v53 = vsel %vm52, %v45, %v48
    %v54 = vrot.slane %v42, 4
    %vm56 = vcmask 1043456
    %v57 = vsel %vm56, %v51, %v54
    %v58 = vpack.c.bf16 %v53, %v57
    %60 = vset.pattern.permute.xlu0 0
    %61 = vperm.xlu0 %60, %v36
    %v62 = vpop.permute.xlu0 %61
    %vm64 = vcmask 97280
    %v66 = vsel %vm64, %v34, 0
    %vm68 = vcmask 1045504
    %v70 = vsel %vm68, %v58, 0
    %72 = vmatprep.subr.bf16.mxu0 0
    %73 = vmatpush1.bf16.msra.mxu0 0
    %74 = vmatprep.subr.bf16.mxu0 0
    %75 = vmatpush1.bf16.msra.mxu0 0
    %76 = vmatprep.subr.bf16.mxu0 0
    %77 = vmatpush1.bf16.msra.mxu0 0
    %78 = vmatprep.subr.bf16.mxu0 0
    %79 = vmatpush1.bf16.msra.mxu0 0
    %80 = vmatprep.subr.bf16.mxu0 0
    %81 = vmatpush1.bf16.msra.mxu0 0
    %82 = vmatprep.subr.bf16.mxu0 0
    %83 = vmatpush1.bf16.msra.mxu0 0
    %84 = vmatprep.subr.bf16.mxu0 0
    %85 = vmatpush1.bf16.msra.mxu0 0
    %86 = vmatprep.subr.bf16.mxu0 0
    %87 = vmatpush1.bf16.msra.mxu0 %v70
    %88 = vmatprep.subr.bf16.mxu0 0
    %89 = vmatpush2.bf16.msra.mxu0 0
    %90 = vmatprep.subr.bf16.mxu0 0
    %91 = vmatpush2.bf16.msra.mxu0 0
    %92 = vmatprep.subr.bf16.mxu0 0
    %93 = vmatpush2.bf16.msra.mxu0 0
    %94 = vmatprep.subr.bf16.mxu0 0
    %95 = vmatpush2.bf16.msra.mxu0 0
    %96 = vmatprep.subr.bf16.mxu0 0
    %97 = vmatpush2.bf16.msra.mxu0 0
    %98 = vmatprep.subr.bf16.mxu0 0
    %99 = vmatpush2.bf16.msra.mxu0 0
    %100 = vmatprep.subr.bf16.mxu0 0
    %101 = vmatpush2.bf16.msra.mxu0 0
    %102 = vmatprep.subr.bf16.mxu0 0
    %103 = vmatpush2.bf16.msra.mxu0 0
    %104 = vmatprep.mubr.bf16.mxu0 0
    %105 = vmatmul.mubr.bf16.gmra.mxu0 %v66
    %v106 = vpop.f32.mrf.mxu0
    %v107 = vadd.f32 %v62, %v106
    %v108 = vpop.f32.mrf.mxu0
    %v109 = vpop.f32.mrf.mxu0
    %v110 = vpop.f32.mrf.mxu0
    %111 = vdwg.mxu0
    %vm112 = vcmask 125952
    %v113 = vsel %vm112, %v107, 0.0
    %114 = vadd.xlane.f32.xlu0 %v113
    %v115 = vpop.xlane.xlu0 %114
    %v116 = vrcp.pop 16.0
    %v117 = vmul.f32 %v115, %v116
    %v118 = vsub.f32 %v107, %v117
    %v119 = vmul.f32 %v118, %v118
    %v120 = vsel %vm112, %v119, 0.0
    %121 = vadd.xlane.f32.xlu0 %v120
    %v122 = vpop.xlane.xlu0 %121
    %v123 = vmul.f32 %v122, %v116
    %v124 = vadd.f32 %v123, 1e-05
    %v125 = vrsqrt.pop %v124
    %v126 = vmul.f32 %v118, %v125
    %128 = vset.pattern.permute.xlu0 0
    %129 = vperm.xlu0 %128, %v37
    %v130 = vpop.permute.xlu0 %129
    %v132 = vmul.f32 %v130, %v126
    %134 = vset.pattern.permute.xlu0 0
    %135 = vperm.xlu0 %134, %v38
    %v136 = vpop.permute.xlu0 %135
    %v138 = vadd.f32 %v132, %v136
    %v139 = vmax.f32 %v138, 0.0
    %141 = vrot.lane.b32.xlu0 %v139, 127
    %v142 = vpop.permute.xlu0 %141
    %144 = vrot.lane.b32.xlu0 %v139, 1
    %v145 = vpop.permute.xlu0 %144
    %v147 = vsel %vm50, %v142, %v145
    %v148 = vsel %vm52, %v142, %v145
    %v149 = vrot.slane %v139, 4
    %v151 = vsel %vm56, %v147, %v149
    %v152 = vpack.c.bf16 %v148, %v151
    %154 = vset.pattern.permute.xlu0 0
    %155 = vperm.xlu0 %154, %v39
    %v156 = vpop.permute.xlu0 %155
    %v159 = vsel %vm64, %v35, 0
    %v162 = vsel %vm68, %v152, 0
    %164 = vmatprep.subr.bf16.mxu0 0
    %165 = vmatpush1.bf16.msra.mxu0 0
    %166 = vmatprep.subr.bf16.mxu0 0
    %167 = vmatpush1.bf16.msra.mxu0 0
    %168 = vmatprep.subr.bf16.mxu0 0
    %169 = vmatpush1.bf16.msra.mxu0 0
    %170 = vmatprep.subr.bf16.mxu0 0
    %171 = vmatpush1.bf16.msra.mxu0 0
    %172 = vmatprep.subr.bf16.mxu0 0
    %173 = vmatpush1.bf16.msra.mxu0 0
    %174 = vmatprep.subr.bf16.mxu0 0
    %175 = vmatpush1.bf16.msra.mxu0 0
    %176 = vmatprep.subr.bf16.mxu0 0
    %177 = vmatpush1.bf16.msra.mxu0 0
    %178 = vmatprep.subr.bf16.mxu0 0
    %179 = vmatpush1.bf16.msra.mxu0 %v162
    %180 = vmatprep.subr.bf16.mxu0 0
    %181 = vmatpush2.bf16.msra.mxu0 0
    %182 = vmatprep.subr.bf16.mxu0 0
    %183 = vmatpush2.bf16.msra.mxu0 0
    %184 = vmatprep.subr.bf16.mxu0 0
    %185 = vmatpush2.bf16.msra.mxu0 0
    %186 = vmatprep.subr.bf16.mxu0 0
    %187 = vmatpush2.bf16.msra.mxu0 0
    %188 = vmatprep.subr.bf16.mxu0 0
    %189 = vmatpush2.bf16.msra.mxu0 0
    %190 = vmatprep.subr.bf16.mxu0 0
    %191 = vmatpush2.bf16.msra.mxu0 0
    %192 = vmatprep.subr.bf16.mxu0 0
    %193 = vmatpush2.bf16.msra.mxu0 0
    %194 = vmatprep.subr.bf16.mxu0 0
    %195 = vmatpush2.bf16.msra.mxu0 0
    %196 = vmatprep.mubr.bf16.mxu0 0
    %197 = vmatmul.mubr.bf16.gmra.mxu0 %v159
    %v198 = vpop.f32.mrf.mxu0
    %v199 = vadd.f32 %v156, %v198
    %v200 = vpop.f32.mrf.mxu0
    %v201 = vpop.f32.mrf.mxu0
    %v202 = vpop.f32.mrf.mxu0
    %203 = vdwg.mxu0
    %v204 = vsel %vm112, %v199, 0.0
    %205 = vadd.xlane.f32.xlu0 %v204
    %v206 = vpop.xlane.xlu0 %205
    %v207 = vmul.f32 %v206, %v116
    %v208 = vsub.f32 %v199, %v207
    %v209 = vmul.f32 %v208, %v208
    %v210 = vsel %vm112, %v209, 0.0
    %211 = vadd.xlane.f32.xlu0 %v210
    %v212 = vpop.xlane.xlu0 %211
    %v213 = vmul.f32 %v212, %v116
    %v214 = vadd.f32 %v213, 1e-05
    %v215 = vrsqrt.pop %v214
    %v216 = vmul.f32 %v208, %v215
    %218 = vset.pattern.permute.xlu0 0
    %219 = vperm.xlu0 %218, %v40
    %v220 = vpop.permute.xlu0 %219
    %v222 = vmul.f32 %v220, %v216
    %224 = vset.pattern.permute.xlu0 0
    %225 = vperm.xlu0 %224, %v41
    %v226 = vpop.permute.xlu0 %225
    %v228 = vadd.f32 %v222, %v226
    %v229 = vadd.f32 %v228, %v42
    %230 = vst.msk [vmem:[#allocation2] sm:$0xf] %vm112, %v229
    %s231 = scalar_lea.vmem %s0, 4
    %v232 = vld [vmem:[%s231] sm:$0xf]
    %234 = vrot.lane.b32.xlu0 %v232, 127
    %v235 = vpop.permute.xlu0 %234
    %237 = vrot.lane.b32.xlu0 %v232, 1
    %v238 = vpop.permute.xlu0 %237
    %v240 = vsel %vm50, %v235, %v238
    %v241 = vsel %vm52, %v235, %v238
    %v242 = vrot.slane %v232, 4
    %v244 = vsel %vm56, %v240, %v242
    %v245 = vpack.c.bf16 %v241, %v244
    %v247 = vsel %vm68, %v245, 0
    %249 = vmatprep.subr.bf16.mxu0 0
    %250 = vmatpush1.bf16.msra.mxu0 0
    %251 = vmatprep.subr.bf16.mxu0 0
    %252 = vmatpush1.bf16.msra.mxu0 0
    %253 = vmatprep.subr.bf16.mxu0 0
    %254 = vmatpush1.bf16.msra.mxu0 0
    %255 = vmatprep.subr.bf16.mxu0 0
    %256 = vmatpush1.bf16.msra.mxu0 0
    %257 = vmatprep.subr.bf16.mxu0 0
    %258 = vmatpush1.bf16.msra.mxu0 0
    %259 = vmatprep.subr.bf16.mxu0 0
    %260 = vmatpush1.bf16.msra.mxu0 0
    %261 = vmatprep.subr.bf16.mxu0 0
    %262 = vmatpush1.bf16.msra.mxu0 0
    %263 = vmatprep.subr.bf16.mxu0 0
    %264 = vmatpush1.bf16.msra.mxu0 %v247
    %265 = vmatprep.subr.bf16.mxu0 0
    %266 = vmatpush2.bf16.msra.mxu0 0
    %267 = vmatprep.subr.bf16.mxu0 0
    %268 = vmatpush2.bf16.msra.mxu0 0
    %269 = vmatprep.subr.bf16.mxu0 0
    %270 = vmatpush2.bf16.msra.mxu0 0
    %271 = vmatprep.subr.bf16.mxu0 0
    %272 = vmatpush2.bf16.msra.mxu0 0
    %273 = vmatprep.subr.bf16.mxu0 0
    %274 = vmatpush2.bf16.msra.mxu0 0
    %275 = vmatprep.subr.bf16.mxu0 0
    %276 = vmatpush2.bf16.msra.mxu0 0
    %277 = vmatprep.subr.bf16.mxu0 0
    %278 = vmatpush2.bf16.msra.mxu0 0
    %279 = vmatprep.subr.bf16.mxu0 0
    %280 = vmatpush2.bf16.msra.mxu0 0
    %281 = vmatprep.mubr.bf16.mxu0 0
    %282 = vmatmul.mubr.bf16.gmra.mxu0 %v66
    %v283 = vpop.f32.mrf.mxu0
    %v284 = vadd.f32 %v62, %v283
    %v285 = vpop.f32.mrf.mxu0
    %v286 = vpop.f32.mrf.mxu0
    %v287 = vpop.f32.mrf.mxu0
    %288 = vdwg.mxu0
    %v289 = vsel %vm112, %v284, 0.0
    %290 = vadd.xlane.f32.xlu0 %v289
    %v291 = vpop.xlane.xlu0 %290
    %v292 = vmul.f32 %v291, %v116
    %v293 = vsub.f32 %v284, %v292
    %v294 = vmul.f32 %v293, %v293
    %v295 = vsel %vm112, %v294, 0.0
    %296 = vadd.xlane.f32.xlu0 %v295
    %v297 = vpop.xlane.xlu0 %296
    %v298 = vmul.f32 %v297, %v116
    %v299 = vadd.f32 %v298, 1e-05
    %v300 = vrsqrt.pop %v299
    %v301 = vmul.f32 %v293, %v300
    %v302 = vmul.f32 %v130, %v301
    %v303 = vadd.f32 %v302, %v136
    %v304 = vmax.f32 %v303, 0.0
    %306 = vrot.lane.b32.xlu0 %v304, 127
    %v307 = vpop.permute.xlu0 %306
    %309 = vrot.lane.b32.xlu0 %v304, 1
    %v310 = vpop.permute.xlu0 %309
    %v312 = vsel %vm50, %v307, %v310
    %v313 = vsel %vm52, %v307, %v310
    %v314 = vrot.slane %v304, 4
    %v316 = vsel %vm56, %v312, %v314
    %v317 = vpack.c.bf16 %v313, %v316
    %v319 = vsel %vm68, %v317, 0
    %321 = vmatprep.subr.bf16.mxu0 0
    %322 = vmatpush1.bf16.msra.mxu0 0
    %323 = vmatprep.subr.bf16.mxu0 0
    %324 = vmatpush1.bf16.msra.mxu0 0
    %325 = vmatprep.subr.bf16.mxu0 0
    %326 = vmatpush1.bf16.msra.mxu0 0
    %327 = vmatprep.subr.bf16.mxu0 0
    %328 = vmatpush1.bf16.msra.mxu0 0
    %329 = vmatprep.subr.bf16.mxu0 0
    %330 = vmatpush1.bf16.msra.mxu0 0
    %331 = vmatprep.subr.bf16.mxu0 0
    %332 = vmatpush1.bf16.msra.mxu0 0
    %333 = vmatprep.subr.bf16.mxu0 0
    %334 = vmatpush1.bf16.msra.mxu0 0
    %335 = vmatprep.subr.bf16.mxu0 0
    %336 = vmatpush1.bf16.msra.mxu0 %v319
    %337 = vmatprep.subr.bf16.mxu0 0
    %338 = vmatpush2.bf16.msra.mxu0 0
    %339 = vmatprep.subr.bf16.mxu0 0
    %340 = vmatpush2.bf16.msra.mxu0 0
    %341 = vmatprep.subr.bf16.mxu0 0
    %342 = vmatpush2.bf16.msra.mxu0 0
    %343 = vmatprep.subr.bf16.mxu0 0
    %344 = vmatpush2.bf16.msra.mxu0 0
    %345 = vmatprep.subr.bf16.mxu0 0
    %346 = vmatpush2.bf16.msra.mxu0 0
    %347 = vmatprep.subr.bf16.mxu0 0
    %348 = vmatpush2.bf16.msra.mxu0 0
    %349 = vmatprep.subr.bf16.mxu0 0
    %350 = vmatpush2.bf16.msra.mxu0 0
    %351 = vmatprep.subr.bf16.mxu0 0
    %352 = vmatpush2.bf16.msra.mxu0 0
    %353 = vmatprep.mubr.bf16.mxu0 0
    %354 = vmatmul.mubr.bf16.gmra.mxu0 %v159
    %v355 = vpop.f32.mrf.mxu0
    %v356 = vadd.f32 %v156, %v355
    %v357 = vpop.f32.mrf.mxu0
    %v358 = vpop.f32.mrf.mxu0
    %v359 = vpop.f32.mrf.mxu0
    %360 = vdwg.mxu0
    %v361 = vsel %vm112, %v356, 0.0
    %362 = vadd.xlane.f32.xlu0 %v361
    %v363 = vpop.xlane.xlu0 %362
    %v364 = vmul.f32 %v363, %v116
    %v365 = vsub.f32 %v356, %v364
    %v366 = vmul.f32 %v365, %v365
    %v367 = vsel %vm112, %v366, 0.0
    %368 = vadd.xlane.f32.xlu0 %v367
    %v369 = vpop.xlane.xlu0 %368
    %v370 = vmul.f32 %v369, %v116
    %v371 = vadd.f32 %v370, 1e-05
    %v372 = vrsqrt.pop %v371
    %v373 = vmul.f32 %v365, %v372
    %v374 = vmul.f32 %v220, %v373
    %v375 = vadd.f32 %v374, %v226
    %v376 = vadd.f32 %v375, %v232
    %s377 = scalar_lea.vmem [#allocation2], 4
    %378 = vst.msk [vmem:[%s377] sm:$0xf] %vm112, %v376
    // Predicated region
    $region38: #{tpu_custom_call.1} parent=1 // pred_check
      _
    $region39: #{tpu_custom_call.1} parent=1 // pred_check_branch
      %380 = sbr.rel (0) target = $region41
    $region40: #{tpu_custom_call.1} parent=1 // pred_region
      %s382 = ssub.s32 128, 128
      %383 = vsyncadd [#allocation3], %s382
      %s384 = sshll.u32 [#allocation2], 4
      %s385 = int_to_ptr.vmem [resolvable:$true] %s384
      %390 = dma.vmem_to_hbm [thread:$0]  %s385, 128, %s9, [#allocation3], 64, 64, 4
    $region41: #{tpu_custom_call.1} parent=1 // pred_fallthru
      _
    // Predicated region
    $region42: #{tpu_custom_call.1} parent=1 // pred_check
      _
    $region43: #{tpu_custom_call.1} parent=1 // pred_check_branch
      %392 = sbr.rel (0) target = $region45
    $region44: #{tpu_custom_call.1} parent=1 // pred_region
      %393 = dma.done [#allocation3], 128
    $region45: #{tpu_custom_call.1} parent=1 // pred_fallthru
      _
    %394 = vsyncpa [#allocation3], 1

</llo_original>
